<compile_context>
chip_gen: v7x
topology: tpu7x:2x2x1
jax: 0.10.0
libtpu: 0.0.40
codegen_flags: <defaults>
</compile_context>

<pallas_src>
import functools

import jax
import jax.numpy as jnp
from jax.experimental import pallas as pl
from jax.experimental.pallas import tpu as pltpu


def _round_up(x, m):
    return ((x + m - 1) // m) * m


def _transr_kernel(tile_rel_ref, d_ref, proj_ref, rel_ref, out_ref, *, p):
    # tile_rel_ref : (num_tiles,) SMEM scalar prefetch (only used by index_maps)
    # d_ref        : (D, te)    head-minus-tail features, edges on the lane axis
    # proj_ref     : (1, R, D)  shared projection matrix of this tile's relation (pre-transposed)
    # rel_ref      : (1, R, 1)  relation embedding as a column
    # out_ref      : (1, 1, te) scores (lane-dense)
    del tile_rel_ref

    d = d_ref[...]                        # (D, te)  compute dtype (bf16)
    m_t = proj_ref[0]                     # (R, D)   compute dtype (bf16)
    r = rel_ref[0].astype(jnp.float32)    # (R, 1)   f32

    # MXU: project the (head - tail) difference of every edge in the tile.
    pd = jnp.dot(m_t, d, preferred_element_type=jnp.float32)  # (R, te) f32
    diff = pd + r                                             # broadcast over lanes

    if p == 1:
        norm = jnp.sum(jnp.abs(diff), axis=0, keepdims=True)           # (1, te)
    else:  # p == 2
        norm = jnp.sqrt(jnp.sum(diff * diff, axis=0, keepdims=True))   # (1, te)

    out_ref[0] = (-norm).astype(out_ref.dtype)                         # (1, te)


def transr_score(h_head, h_tail, rels, rel_emb, rel_project, *, p=1,
                 block_e=1024, compute_dtype=jnp.bfloat16):
    """TransR score -||M_r h + r - M_r t||_p for each triple.

    h_head, h_tail : (E, nfeats) float32
    rels           : (E,)        int32
    rel_emb        : (num_rels, rfeats)
    rel_project    : (num_rels, nfeats * rfeats)   (row-major (nfeats, rfeats) flattening)
    returns        : (E,)        float32
    """
    if p not in (1, 2):
        raise ValueError("p must be 1 or 2")

    E, D = h_head.shape
    num_rels, R = rel_emb.shape

    # Edge tile: multiple of 128 (edges sit on lanes), clamped for tiny E.
    te = int(block_e)
    te = max(128, min(te, _round_up(E, 128)))
    te = _round_up(te, 128)

    rels = rels.astype(jnp.int32)

    # d = h - t once (linearity of the projection), bf16 for halved HBM traffic.
    d = (h_head - h_tail).astype(compute_dtype)                      # (E, D)

    # ---- group edges by relation (plain-JAX glue) --------------------------
    order = jnp.argsort(rels)                                        # (E,)
    rels_sorted = rels[order]
    d_sorted = d[order]                                              # (E, D)

    counts = jnp.bincount(rels, length=num_rels).astype(jnp.int32)   # (num_rels,)
    group_start = jnp.concatenate(
        [jnp.zeros((1,), jnp.int32), jnp.cumsum(counts)[:-1].astype(jnp.int32)])
    tiles_per_group = (counts + te - 1) // te
    pad_sizes = tiles_per_group * te
    pad_offsets = jnp.concatenate(
        [jnp.zeros((1,), jnp.int32), jnp.cumsum(pad_sizes)[:-1].astype(jnp.int32)])
    pad_end = pad_offsets + pad_sizes

    # Static upper bound on the padded, relation-blocked edge count.
    E_pad = _round_up(E, te) + num_rels * te
    num_tiles = E_pad // te

    # Destination slot of each sorted edge inside the padded layout.
    sorted_pos = jnp.arange(E, dtype=jnp.int32)
    dest = pad_offsets[rels_sorted] + (sorted_pos - group_start[rels_sorted])  # (E,)

    # Padded, transposed activations: (D, E_pad), edges on the lane axis.
    dT_pad = jnp.zeros((D, E_pad), compute_dtype).at[:, dest].set(d_sorted.T)

    # Per-tile relation id (scalar prefetch; drives proj/rel index_maps).
    tile_starts = jnp.arange(num_tiles, dtype=jnp.int32) * te
    tile_group = jnp.sum((tile_starts[:, None] >= pad_end[None, :]).astype(jnp.int32),
                         axis=1)
    tile_group = jnp.minimum(tile_group, num_rels - 1).astype(jnp.int32)

    # Relation parameters, deduplicated and relation-major.
    proj_t = (rel_project.reshape(num_rels, D, R)
              .transpose(0, 2, 1)
              .astype(compute_dtype))                                # (num_rels, R, D)
    rel_col = rel_emb.reshape(num_rels, R, 1).astype(jnp.float32)    # (num_rels, R, 1)

    kernel = functools.partial(_transr_kernel, p=p)

    out = pl.pallas_call(
        kernel,
        out_shape=jax.ShapeDtypeStruct((num_tiles, 1, te), jnp.float32),
        grid_spec=pltpu.PrefetchScalarGridSpec(
            num_scalar_prefetch=1,
            grid=(num_tiles,),
            in_specs=[
                pl.BlockSpec((D, te), lambda i, tg: (0, i)),            # dT_pad
                pl.BlockSpec((1, R, D), lambda i, tg: (tg[i], 0, 0)),   # proj_t
                pl.BlockSpec((1, R, 1), lambda i, tg: (tg[i], 0, 0)),   # rel_col
            ],
            out_specs=pl.BlockSpec((1, 1, te), lambda i, tg: (i, 0, 0)),
        ),
        compiler_params=pltpu.CompilerParams(
            dimension_semantics=("parallel",),
            vmem_limit_bytes=32 * 1024 * 1024,
        ),
    )(tile_group, dT_pad, proj_t, rel_col)

    # Un-pad / un-sort back to the original edge order.
    scores_pad = out.reshape(-1)                       # (E_pad,)
    scores_sorted = scores_pad[dest]                   # (E,) in sorted order
    scores = jnp.zeros((E,), jnp.float32).at[order].set(scores_sorted)
    return scores


def transr_reference(h_head, h_tail, rels, rel_emb, rel_project, *, p=1,
                     compute_dtype=jnp.float32):
    """Pure-JAX reference (optionally mirroring the kernel's bf16 casts)."""
    E, D = h_head.shape
    num_rels, R = rel_emb.shape
    proj = rel_project.reshape(num_rels, D, R)
    d = (h_head - h_tail).astype(compute_dtype)
    M = proj[rels].astype(compute_dtype)               # (E, D, R)
    pd = jnp.einsum("ed,edr->er", d, M, preferred_element_type=jnp.float32)
    diff = pd + rel_emb[rels]
    if p == 1:
        return -jnp.sum(jnp.abs(diff), axis=-1)
    return -jnp.sqrt(jnp.sum(diff * diff, axis=-1))


if __name__ == "__main__":
    # Small deterministic setup consistent with the module:
    #   num_rels=3, rfeats=16, nfeats=32, E=1000 triples (not a tile multiple).
    num_rels = 3
    rfeats = 16
    nfeats = 32
    E = 1000

    key = jax.random.PRNGKey(0)
    k1, k2, k3, k4, k5 = jax.random.split(key, 5)

    # nn.Embedding default init ~ N(0, 1).
    rel_emb = jax.random.normal(k1, (num_rels, rfeats), dtype=jnp.float32)
    rel_project = jax.random.normal(k2, (num_rels, nfeats * rfeats), dtype=jnp.float32)
    h_head = jax.random.normal(k3, (E, nfeats), dtype=jnp.float32)
    h_tail = jax.random.normal(k4, (E, nfeats), dtype=jnp.float32)
    rels = jax.random.randint(k5, (E,), 0, num_rels, dtype=jnp.int32)

    for p in (1, 2):
        scores = transr_score(h_head, h_tail, rels, rel_emb, rel_project,
                              p=p, block_e=256)
        scores = jax.block_until_ready(scores)
        assert scores.shape == (E,)

        # Check against a reference that mirrors the kernel's bf16 casts (tight)
        # and against the exact f32 module semantics (loose, bf16 rounding).
        ref_bf16 = transr_reference(h_head, h_tail, rels, rel_emb, rel_project,
                                    p=p, compute_dtype=jnp.bfloat16)
        ref_f32 = transr_reference(h_head, h_tail, rels, rel_emb, rel_project,
                                   p=p, compute_dtype=jnp.float32)
        assert jnp.allclose(scores, ref_bf16, atol=1e-2, rtol=1e-3), \
            f"p={p}: mismatch vs bf16-consistent reference"
        assert jnp.allclose(scores, ref_f32, atol=0.5, rtol=2e-2), \
            f"p={p}: mismatch vs f32 reference"

    print("KERNEL_OK")
</pallas_src>

<mosaic_0001>
module attributes {stable_mosaic.version = 11 : i64} {
  func.func @_transr_kernel(%arg0: i32, %arg1: memref<7xi32, #tpu.memory_space<smem>>, %arg2: memref<32x256xbf16, #tpu.memory_space<vmem>>, %arg3: memref<1x16x32xbf16, #tpu.memory_space<vmem>>, %arg4: memref<1x16x1xf32, #tpu.memory_space<vmem>>, %arg5: memref<1x1x256xf32, #tpu.memory_space<vmem>>) attributes {dimension_semantics = [#tpu.dimension_semantics<parallel>], iteration_bounds = array<i64: 7>, scalar_prefetch = 1 : i64, scratch_operands = 0 : i64, tpu.core_type = #tpu.core_type<tc>, window_params = [{transform_indices = @transform_0, window_bounds = array<i64: 32, 256>}, {transform_indices = @transform_1, window_bounds = array<i64: 1, 16, 32>}, {transform_indices = @transform_2, window_bounds = array<i64: 1, 16, 1>}, {transform_indices = @transform_3, window_bounds = array<i64: 1, 1, 256>}]} {
    %c0 = arith.constant 0 : index
    %c0_0 = arith.constant 0 : index
    %0 = vector.load %arg2[%c0, %c0_0] : memref<32x256xbf16, #tpu.memory_space<vmem>>, vector<32x256xbf16>
    %c0_1 = arith.constant 0 : index
    %c0_2 = arith.constant 0 : index
    %c0_3 = arith.constant 0 : index
    %1 = vector.load %arg3[%c0_1, %c0_2, %c0_3] : memref<1x16x32xbf16, #tpu.memory_space<vmem>>, vector<1x16x32xbf16>
    %2 = vector.shape_cast %1 : vector<1x16x32xbf16> to vector<16x32xbf16>
    %c0_4 = arith.constant 0 : index
    %c0_5 = arith.constant 0 : index
    %c0_6 = arith.constant 0 : index
    %3 = vector.load %arg4[%c0_4, %c0_5, %c0_6] : memref<1x16x1xf32, #tpu.memory_space<vmem>>, vector<1x16x1xf32>
    %4 = vector.shape_cast %3 : vector<1x16x1xf32> to vector<16x1xf32>
    %cst = arith.constant dense<0.000000e+00> : vector<16x256xf32>
    %5 = tpu.matmul %2, %0, %cst {dimension_numbers = #tpu.dot_dimension_numbers<[1], [0], [0], [1], [0, 0, 1, 1], [], []>} : vector<16x32xbf16>, vector<32x256xbf16>, vector<16x256xf32> -> vector<16x256xf32>
    %6 = vector.broadcast %4 : vector<16x1xf32> to vector<16x256xf32>
    %7 = arith.addf %5, %6 : vector<16x256xf32>
    %8 = math.absf %7 : vector<16x256xf32>
    %cst_7 = arith.constant dense<0.000000e+00> : vector<256xf32>
    %9 = vector.multi_reduction <add>, %8, %cst_7 [0] : vector<16x256xf32> to vector<256xf32>
    %10 = vector.shape_cast %9 : vector<256xf32> to vector<1x256xf32>
    %cst_8 = arith.constant 0.000000e+00 : f32
    %11 = vector.broadcast %cst_8 : f32 to vector<1x256xf32>
    %12 = arith.subf %11, %10 : vector<1x256xf32>
    %c0_9 = arith.constant 0 : index
    %c0_10 = arith.constant 0 : index
    %c0_11 = arith.constant 0 : index
    %13 = vector.load %arg5[%c0_9, %c0_10, %c0_11] : memref<1x1x256xf32, #tpu.memory_space<vmem>>, vector<1x1x256xf32>
    %14 = vector.shape_cast %13 : vector<1x1x256xf32> to vector<1x256xf32>
    %15 = vector.shape_cast %12 : vector<1x256xf32> to vector<1x1x256xf32>
    tpu.vector_store %arg5[%c0_9, %c0_10, %c0_11], %15 {strides = array<i32>} : memref<1x1x256xf32, #tpu.memory_space<vmem>>, vector<1x1x256xf32>,
    return
  }
  func.func @transform_0(%arg0: i32, %arg1: memref<7xi32, #tpu.memory_space<smem>>) -> (i32, i32) {
    %c0_i32 = arith.constant 0 : i32
    %c0_i32_0 = arith.constant 0 : i32
    return %c0_i32, %arg0 : i32, i32
  }
  func.func @transform_1(%arg0: i32, %arg1: memref<7xi32, #tpu.memory_space<smem>>) -> (i32, i32, i32) {
    %0 = arith.index_cast %arg0 : i32 to index
    %1 = memref.load %arg1[%0] : memref<7xi32, #tpu.memory_space<smem>>
    %c0_i32 = arith.constant 0 : i32
    %c0_i32_0 = arith.constant 0 : i32
    %c0_i32_1 = arith.constant 0 : i32
    return %1, %c0_i32, %c0_i32_0 : i32, i32, i32
  }
  func.func @transform_2(%arg0: i32, %arg1: memref<7xi32, #tpu.memory_space<smem>>) -> (i32, i32, i32) {
    %0 = arith.index_cast %arg0 : i32 to index
    %1 = memref.load %arg1[%0] : memref<7xi32, #tpu.memory_space<smem>>
    %c0_i32 = arith.constant 0 : i32
    %c0_i32_0 = arith.constant 0 : i32
    %c0_i32_1 = arith.constant 0 : i32
    return %1, %c0_i32, %c0_i32_0 : i32, i32, i32
  }
  func.func @transform_3(%arg0: i32, %arg1: memref<7xi32, #tpu.memory_space<smem>>) -> (i32, i32, i32) {
    %c0_i32 = arith.constant 0 : i32
    %c0_i32_0 = arith.constant 0 : i32
    %c0_i32_1 = arith.constant 0 : i32
    return %arg0, %c0_i32, %c0_i32_0 : i32, i32, i32
  }
}

</mosaic_0001>

<llo_original>
// kernel: tpu_custom_call.1
$region0: #{tpu_custom_call.1}
  #allocation0 [shape = 'u32[]', space=smem, size = 0x4, offset = 0x4, fixed_abs, tag = 'smem constant byte address 0x4 - core index']
  #allocation1 [shape = 'u32[144,128]{1,0:T(1,128)}', space=vmem, size = 0x12000, scoped, tag = 'internal scratch']
  #allocation2 [shape = 's32[1]{0}', space=sflag, size = 0x4, scoped, tag = 'scoped memory for tpu_custom_call.1']
  #allocation3 [shape = 'u8[512]{0}', space=smem, size = 0x200, scoped, tag = 'prefetched SMEM operand 0']
  %s0 = inlined_call_operand.vmem [shape: s32[7], index: 0, kind: input, shape index: {}]
  %s1 = inlined_call_operand.hbm [shape: bf16[32,1792], index: 1, kind: input, shape index: {}]
  %s2 = inlined_call_operand.vmem [shape: bf16[3,16,32], index: 2, kind: input, shape index: {}]
  %s3 = inlined_call_operand.vmem [shape: f32[3,16,1], index: 3, kind: input, shape index: {}]
  %s4 = inlined_call_operand.hbm [shape: f32[7,1,256], index: 4, kind: output, shape index: {}]
  %s5 = sld [smem:[#allocation0]]
  $region49: #{tpu_custom_call.1} parent=0
    _
  %s7 = ssub.s32 1, %s5
  %s8 = scalar_select 0, %s7, %s5
  %s9 = sshll.u32 %s0, 4
  %s10 = int_to_ptr.vmem [resolvable:$true] %s9
  %12 = dma.vmem_to_smem %s10, 16, [#allocation3], [#allocation2]
  %13 = dma.done [#allocation2], 16
  %14 = sfence
  $region1: #{tpu_custom_call.1} parent=0
    #allocation4 [shape = 'u8[32768]{0}', space=vmem, size = 0x8000, scoped, tag = 'input window, operand 1']
    #allocation5 [shape = 's32[2]{0}', space=sflag, size = 0x8, scoped, tag = 'scoped memory for tpu_custom_call.1']
    #allocation6 [shape = 's32[2]{0}', space=sflag, size = 0x8, scoped, tag = 'scoped memory for tpu_custom_call.1']
    #allocation7 [shape = 'u8[2048]{0}', space=vmem, size = 0x800, scoped, tag = 'output window, operand 0']
    %15 = vsyncpa [#allocation5], 0
    %s16 = scalar_lea.sflag [#allocation5], 1
    %17 = vsyncpa %s16, 0
    %18 = vsyncpa [#allocation6], 0
    %s19 = scalar_lea.sflag [#allocation6], 1
    %20 = vsyncpa %s19, 0
    loop: start=0, step=1, limit=9
    $region2: #{tpu_custom_call.1} parent=1 // loop_pre_header
      _
    $region3: #{tpu_custom_call.1} parent=1 // loop_header
      %s22 = sphi 0, %s26
      %p23 = scmp.ge.s32.totalorder %s22, 9
      %s32 = sphi 0, %s34
      %s35 = sphi 0, %s32
      %s36 = sphi 0, %s35
      %s52 = sphi 0, %s36
      %s60 = sphi 0, %s62
      %s63 = sphi 0, %s60
      %s64 = sphi 0, %s63
      %s80 = sphi 0, %s64
      %s88 = sphi 0, %s90
      %s91 = sphi 0, %s88
      %s92 = sphi 0, %s91
      %s108 = sphi 0, %s92
      %s114 = sphi 0, %s116
      %s117 = sphi 0, %s114
      %s118 = sphi 0, %s117
      %s134 = sphi 0, %s118
    $region4: #{tpu_custom_call.1} parent=1 // loop_header_branch
      %25 = sbr.rel (%p23) target = $region8
    $region5: #{tpu_custom_call.1} parent=1 // loop_body
      %s27 = ssub.s32 %s22, 1
      %s28 = ssub.s32 %s22, 2
      %s29 = sadd.s32 %s22, 1
      %s30 = ssub.s32 %s22, %s29
      %p31 = scmp.eq.s32.totalorder %s30, 0
      %s33 = sadd.s32 %s32, 1
      %s34 = scalar_select %p31, %s32, %s33
      %p37 = pneg %p31
      %p38 = scmp.eq.s32.totalorder %s22, 6
      %p39 = por %p37, %p38
      %p40 = scmp.ne.s32.totalorder %s32, %s35
      %p41 = scmp.eq.s32.totalorder %s22, 0
      %p42 = por %p40, %p41
      %p43 = scmp.ne.s32.totalorder %s32, %s35
      %p44 = scmp.eq.s32.totalorder %s27, 6
      %p45 = por %p43, %p44
      %p46 = scmp.ne.s32.totalorder %s35, %s36
      %p47 = scmp.eq.s32.totalorder %s27, 0
      %p48 = por %p46, %p47
      %p49 = scmp.ne.s32.totalorder %s35, %s36
      %p50 = scmp.eq.s32.totalorder %s28, 6
      %p51 = por %p49, %p50
      %p53 = scmp.ne.s32.totalorder %s36, %s52
      %p54 = scmp.eq.s32.totalorder %s28, 0
      %p55 = por %p53, %p54
      %s56 = sld [smem:[#allocation3 + %s22]]
      %s57 = sld [smem:[#allocation3 + %s29]]
      %s58 = ssub.s32 %s56, %s57
      %p59 = scmp.eq.s32.totalorder %s58, 0
      %s61 = sadd.s32 %s60, 1
      %s62 = scalar_select %p59, %s60, %s61
      %p65 = pneg %p59
      %p66 = scmp.eq.s32.totalorder %s22, 6
      %p67 = por %p65, %p66
      %p68 = scmp.ne.s32.totalorder %s60, %s63
      %p69 = scmp.eq.s32.totalorder %s22, 0
      %p70 = por %p68, %p69
      %p71 = scmp.ne.s32.totalorder %s60, %s63
      %p72 = scmp.eq.s32.totalorder %s27, 6
      %p73 = por %p71, %p72
      %p74 = scmp.ne.s32.totalorder %s63, %s64
      %p75 = scmp.eq.s32.totalorder %s27, 0
      %p76 = por %p74, %p75
      %p77 = scmp.ne.s32.totalorder %s63, %s64
      %p78 = scmp.eq.s32.totalorder %s28, 6
      %p79 = por %p77, %p78
      %p81 = scmp.ne.s32.totalorder %s64, %s80
      %p82 = scmp.eq.s32.totalorder %s28, 0
      %p83 = por %p81, %p82
      %s84 = sld [smem:[#allocation3 + %s22]]
      %s85 = sld [smem:[#allocation3 + %s29]]
      %s86 = ssub.s32 %s84, %s85
      %p87 = scmp.eq.s32.totalorder %s86, 0
      %s89 = sadd.s32 %s88, 1
      %s90 = scalar_select %p87, %s88, %s89
      %p93 = pneg %p87
      %p94 = scmp.eq.s32.totalorder %s22, 6
      %p95 = por %p93, %p94
      %p96 = scmp.ne.s32.totalorder %s88, %s91
      %p97 = scmp.eq.s32.totalorder %s22, 0
      %p98 = por %p96, %p97
      %p99 = scmp.ne.s32.totalorder %s88, %s91
      %p100 = scmp.eq.s32.totalorder %s27, 6
      %p101 = por %p99, %p100
      %p102 = scmp.ne.s32.totalorder %s91, %s92
      %p103 = scmp.eq.s32.totalorder %s27, 0
      %p104 = por %p102, %p103
      %p105 = scmp.ne.s32.totalorder %s91, %s92
      %p106 = scmp.eq.s32.totalorder %s28, 6
      %p107 = por %p105, %p106
      %p109 = scmp.ne.s32.totalorder %s92, %s108
      %p110 = scmp.eq.s32.totalorder %s28, 0
      %p111 = por %p109, %p110
      %s112 = ssub.s32 %s22, %s29
      %p113 = scmp.eq.s32.totalorder %s112, 0
      %s115 = sadd.s32 %s114, 1
      %s116 = scalar_select %p113, %s114, %s115
      %p119 = pneg %p113
      %p120 = scmp.eq.s32.totalorder %s22, 6
      %p121 = por %p119, %p120
      %p122 = scmp.ne.s32.totalorder %s114, %s117
      %p123 = scmp.eq.s32.totalorder %s22, 0
      %p124 = por %p122, %p123
      %p125 = scmp.ne.s32.totalorder %s114, %s117
      %p126 = scmp.eq.s32.totalorder %s27, 6
      %p127 = por %p125, %p126
      %p128 = scmp.ne.s32.totalorder %s117, %s118
      %p129 = scmp.eq.s32.totalorder %s27, 0
      %p130 = por %p128, %p129
      %p131 = scmp.ne.s32.totalorder %s117, %s118
      %p132 = scmp.eq.s32.totalorder %s28, 6
      %p133 = por %p131, %p132
      %p135 = scmp.ne.s32.totalorder %s118, %s134
      %p136 = scmp.eq.s32.totalorder %s28, 0
      %p137 = por %p135, %p136
      %p138 = scmp.le.s32.totalorder 1, %s22
      %p139 = scmp.lt.s32.totalorder %s22, 8
      %p140 = pnand %p138, %p139
      %p141 = pneg %p140
      // Predicated region
      $region9: #{tpu_custom_call.1} parent=5 // pred_check
        _
      $region10: #{tpu_custom_call.1} parent=5 // pred_check_branch
        %143 = sbr.rel (%p140) target = $region12
      $region11: #{tpu_custom_call.1} parent=5 // pred_region
        %s144 = ssub.s32 %s22, 1
      $region12: #{tpu_custom_call.1} parent=5 // pred_fallthru
        _
      %p145 = scmp.lt.s32.totalorder %s22, 7
      // Predicated region
      $region13: #{tpu_custom_call.1} parent=5 // pred_check
        %p146 = pneg %p145
      $region14: #{tpu_custom_call.1} parent=5 // pred_check_branch
        %148 = sbr.rel (%p146) target = $region16
      $region15: #{tpu_custom_call.1} parent=5 // pred_region
        // Predicated region
        $region17: #{tpu_custom_call.1} parent=15 // pred_check
          %p149 = pneg %p42
        $region18: #{tpu_custom_call.1} parent=15 // pred_check_branch
          %151 = sbr.rel (%p149) target = $region20
        $region19: #{tpu_custom_call.1} parent=15 // pred_region
          %s152 = sand.u32 %s32, 1
          %s153 = scalar_lea.sflag [#allocation5], %s152
          %s154 = sand.u32 %s32, 1
          %s155 = smul.addr %s154, 32
          %s156 = scalar_lea.vmem [#allocation4], %s155
          %s157 = smul.u32 2, %s22
          %s159 = ssub.s32 512, 512
          %160 = vsyncadd %s153, %s159
          %s161 = smul.addr %s157, 64
          %s162 = scalar_lea.hbm %s1, %s161
          %s163 = sshll.u32 %s156, 4
          %s164 = int_to_ptr.vmem [resolvable:$true] %s163
          %169 = dma.hbm_to_vmem [thread:$0]  %s162, 512, %s164, %s153, 896, 128, 8
        $region20: #{tpu_custom_call.1} parent=15 // pred_fallthru
          _
        // Predicated region
        $region21: #{tpu_custom_call.1} parent=15 // pred_check
          %p170 = pneg %p70
        $region22: #{tpu_custom_call.1} parent=15 // pred_check_branch
          %172 = sbr.rel (%p170) target = $region24
        $region23: #{tpu_custom_call.1} parent=15 // pred_region
          %s173 = sld [smem:[#allocation3 + %s22]]
          %p174 = scmp.lt.s32.totalorder %s173, 2
          %s175 = scalar_select %p174, %s173, 2
          %s176 = smul.addr %s175, 2
          %s177 = smul.addr %s176, 4
          %s178 = scalar_lea.vmem %s2, %s177
          %s179 = sld [smem:[#allocation3 + %s22]]
        $region24: #{tpu_custom_call.1} parent=15 // pred_fallthru
          _
        // Predicated region
        $region25: #{tpu_custom_call.1} parent=15 // pred_check
          %p180 = pneg %p98
        $region26: #{tpu_custom_call.1} parent=15 // pred_check_branch
          %182 = sbr.rel (%p180) target = $region28
        $region27: #{tpu_custom_call.1} parent=15 // pred_region
          %s183 = sld [smem:[#allocation3 + %s22]]
          %p184 = scmp.lt.s32.totalorder %s183, 2
          %s185 = scalar_select %p184, %s183, 2
          %s186 = smul.addr %s185, 2
          %s187 = smul.addr %s186, 8
          %s188 = scalar_lea.vmem %s3, %s187
          %s189 = sld [smem:[#allocation3 + %s22]]
        $region28: #{tpu_custom_call.1} parent=15 // pred_fallthru
          _
      $region16: #{tpu_custom_call.1} parent=5 // pred_fallthru
        _
      %p190 = scmp.le.s32.totalorder 1, %s22
      %p191 = scmp.lt.s32.totalorder %s22, 8
      %p192 = pnand %p190, %p191
      %p193 = pneg %p192
      // Predicated region
      $region29: #{tpu_custom_call.1} parent=5 // pred_check
        _
      $region30: #{tpu_custom_call.1} parent=5 // pred_check_branch
        %195 = sbr.rel (%p192) target = $region32
      $region31: #{tpu_custom_call.1} parent=5 // pred_region
        %s196 = ssub.s32 %s22, 1
        %s197 = sand.u32 %s35, 1
        %s198 = scalar_lea.sflag [#allocation5], %s197
        %s199 = sand.u32 %s35, 1
        %s200 = smul.addr %s199, 32
        %s201 = scalar_lea.vmem [#allocation4], %s200
        // Predicated region
        $region33: #{tpu_custom_call.1} parent=31 // pred_check
          %p202 = pneg %p48
        $region34: #{tpu_custom_call.1} parent=31 // pred_check_branch
          %204 = sbr.rel (%p202) target = $region36
        $region35: #{tpu_custom_call.1} parent=31 // pred_region
          %205 = dma.done %s198, 512
        $region36: #{tpu_custom_call.1} parent=31 // pred_fallthru
          _
        %s206 = sand.u32 %s35, 1
        %s207 = scalar_lea.sflag [#allocation5], %s206
        %s208 = sand.u32 %s35, 1
        %s209 = smul.addr %s208, 32
        %s210 = scalar_lea.vmem [#allocation4], %s209
        %p211 = pneg %p48
        %p212 = pneg %p45
        %s213 = sld [smem:[#allocation3 + %s27]]
        %p214 = scmp.lt.s32.totalorder %s213, 2
        %s215 = scalar_select %p214, %s213, 2
        %s216 = smul.addr %s215, 2
        %s217 = smul.addr %s216, 4
        %s218 = scalar_lea.vmem %s2, %s217
        %p219 = pneg %p76
        %p220 = pneg %p73
        %s221 = sld [smem:[#allocation3 + %s27]]
        %p222 = scmp.lt.s32.totalorder %s221, 2
        %s223 = scalar_select %p222, %s221, 2
        %s224 = smul.addr %s223, 2
        %s225 = smul.addr %s224, 8
        %s226 = scalar_lea.vmem %s3, %s225
        %p227 = pneg %p104
        %p228 = pneg %p101
        %p229 = pneg %p130
        %p230 = pneg %p127
        %s231 = sand.u32 %s117, 1
        %s232 = scalar_lea.sflag [#allocation6], %s231
        %s233 = sand.u32 %s117, 1
        %s234 = smul.addr %s233, 2
        %s235 = scalar_lea.vmem [#allocation7], %s234
        %s236 = smul.u32 2, %s27
        %s237 = sld [smem:[#allocation3 + %s27]]
        %p238 = scmp.lt.s32.totalorder %s237, 2
        %s239 = scalar_select %p238, %s237, 2
        %s240 = smul.addr %s239, 2
        %s241 = smul.addr %s240, 4
        %s242 = scalar_lea.vmem %s2, %s241
        %s243 = sld [smem:[#allocation3 + %s27]]
        %s244 = sld [smem:[#allocation3 + %s27]]
        %p245 = scmp.lt.s32.totalorder %s244, 2
        %s246 = scalar_select %p245, %s244, 2
        %s247 = smul.addr %s246, 2
        %s248 = smul.addr %s247, 8
        %s249 = scalar_lea.vmem %s3, %s248
        %s250 = sld [smem:[#allocation3 + %s27]]
        %v252 = vld [vmem:[%s201] sm:$0xff]
        %v253 = vld [vmem:[%s201 + $0x8] sm:$0xff]
        %v254 = vld [vmem:[%s201 + $0x10] sm:$0xff]
        %v255 = vld [vmem:[%s201 + $0x18] sm:$0xff]
        %v256 = vld [vmem:[%s242] sm:$0xf]
        %v257 = vld [vmem:[%s242 + $0x4] sm:$0xf]
        %v258 = vld [vmem:[%s249] sm:$0xff]
        %v259 = vld [vmem:[%s249 + $0x8] sm:$0xff]
        %261 = vset.pattern.permute.xlu0 0
        %262 = vperm.xlu0 %261, %v258
        %v263 = vpop.permute.xlu0 %262
        %266 = vset.pattern.permute.xlu0 0
        %267 = vperm.xlu0 %266, %v259
        %v268 = vpop.permute.xlu0 %267
        %v272 = vunpack.c.l.b16 %v256
        %v273 = vunpack.c.l.b16 %v257
        %v274 = vpack.c.b16 %v273, %v272
        %v279 = vunpack.c.l.b16 %v252
        %v280 = vunpack.c.h.b16 %v252
        %v281 = vunpack.c.l.b16 %v253
        %v282 = vunpack.c.h.b16 %v253
        %v283 = vunpack.c.l.b16 %v254
        %v284 = vunpack.c.h.b16 %v254
        %v285 = vunpack.c.l.b16 %v255
        %v286 = vunpack.c.h.b16 %v255
        %v287 = vpack.c.b16 %v281, %v279
        %v288 = vpack.c.b16 %v282, %v280
        %v289 = vpack.c.b16 %v285, %v283
        %v290 = vpack.c.b16 %v286, %v284
        %vm295 = vcmask 261120
        %v297 = vsel %vm295, %v274, 0
        %299 = vmatprep.subr.bf16.mxu0 %v288
        %300 = vmatpush1.bf16.msra.mxu0 %v287
        %301 = vmatprep.subr.bf16.mxu0 %v290
        %302 = vmatpush1.bf16.msra.mxu0 %v289
        %303 = vmatprep.subr.bf16.mxu0 0
        %304 = vmatpush1.bf16.msra.mxu0 0
        %305 = vmatprep.subr.bf16.mxu0 0
        %306 = vmatpush1.bf16.msra.mxu0 0
        %307 = vmatprep.subr.bf16.mxu0 0
        %308 = vmatpush1.bf16.msra.mxu0 0
        %309 = vmatprep.subr.bf16.mxu0 0
        %310 = vmatpush1.bf16.msra.mxu0 0
        %311 = vmatprep.subr.bf16.mxu0 0
        %312 = vmatpush1.bf16.msra.mxu0 0
        %313 = vmatprep.subr.bf16.mxu0 0
        %314 = vmatpush1.bf16.msra.mxu0 0
        %315 = vmatprep.subr.bf16.mxu0 0
        %316 = vmatpush1.bf16.msra.mxu0 0
        %317 = vmatprep.subr.bf16.mxu0 0
        %318 = vmatpush1.bf16.msra.mxu0 0
        %319 = vmatprep.subr.bf16.mxu0 0
        %320 = vmatpush1.bf16.msra.mxu0 0
        %321 = vmatprep.subr.bf16.mxu0 0
        %322 = vmatpush1.bf16.msra.mxu0 0
        %323 = vmatprep.subr.bf16.mxu0 0
        %324 = vmatpush1.bf16.msra.mxu0 0
        %325 = vmatprep.subr.bf16.mxu0 0
        %326 = vmatpush1.bf16.msra.mxu0 0
        %327 = vmatprep.subr.bf16.mxu0 0
        %328 = vmatpush1.bf16.msra.mxu0 0
        %329 = vmatprep.subr.bf16.mxu0 0
        %330 = vmatpush1.bf16.msra.mxu0 0
        %331 = vmatprep.mubr.bf16.mxu0 0
        %332 = vmatmul.mubr.bf16.gmra.mrb[0].mxu0 %v297
        %v333 = vpop.f32.mrb[0].mxu0
        %v334 = vadd.f32 %v263, %v333
        %v335 = vpop.f32.mrb[0].mxu0
        %v336 = vadd.f32 %v263, %v335
        %v337 = vpop.f32.mrb[0].mxu0
        %v338 = vadd.f32 %v268, %v337
        %v339 = vpop.f32.mrb[0].mxu0
        %v340 = vadd.f32 %v268, %v339
        %341 = vdwg.mxu0
        %v342 = vand.u32 2147483647, %v334
        %v343 = vand.u32 2147483647, %v336
        %v344 = vand.u32 2147483647, %v338
        %v345 = vand.u32 2147483647, %v340
        %v346 = vadd.f32 %v342, %v344
        %v347 = vrot.slane %v346, 4
        %v348 = vadd.f32 %v346, %v347
        %v349 = vrot.slane %v348, 2
        %v350 = vadd.f32 %v348, %v349
        %v351 = vrot.slane %v350, 1
        %v352 = vadd.f32 %v350, %v351
        %v353 = vadd.f32 %v343, %v345
        %v354 = vrot.slane %v353, 4
        %v355 = vadd.f32 %v353, %v354
        %v356 = vrot.slane %v355, 2
        %v357 = vadd.f32 %v355, %v356
        %v358 = vrot.slane %v357, 1
        %v359 = vadd.f32 %v357, %v358
        %v360 = vsub.f32 0.0, %v352
        %v361 = vsub.f32 0.0, %v359
        %v364 = vcombine.low %v360, %v361
        %v366 = vunpack.c.l.s4 1966171168
        %v367 = vunpack.c.0.s8 %v366
        %v368 = vlaneseq
        %v369 = vshrl.u32 %v368, 7
        %v370 = vsub.s32 %v367, %v369
        %v371 = vrot.slane %v364, %v370
        %v373 = vunpack.c.l.s4 1966171168
        %v374 = vunpack.c.0.s8 %v373
        %v375 = vlaneseq
        %v376 = vshrl.u32 %v375, 7
        %v377 = vsub.s32 %v374, %v376
        %v378 = vrot.slane %v371, %v377
        %v380 = vlaneseq
        %vm381 = vcmp.ge.s32.totalorder %v380, 0
        %vm382 = vcmp.lt.s32.totalorder %v380, 256
        %vm383 = vmand %vm381, %vm382
        %384 = vst.msk [vmem:[%s235] sm:$0x3] %vm383, %v378
        %s385 = sand.u32 %s117, 1
        %s386 = scalar_lea.sflag [#allocation6], %s385
        %s387 = sand.u32 %s117, 1
        %s388 = smul.addr %s387, 2
        %s389 = scalar_lea.vmem [#allocation7], %s388
        // Predicated region
        $region37: #{tpu_custom_call.1} parent=31 // pred_check
          %p390 = pneg %p127
        $region38: #{tpu_custom_call.1} parent=31 // pred_check_branch
          %392 = sbr.rel (%p390) target = $region40
        $region39: #{tpu_custom_call.1} parent=31 // pred_region
          %s394 = ssub.s32 32, 32
          %395 = vsyncadd %s386, %s394
          %s396 = smul.addr %s27, 2
          %s397 = smul.addr %s396, 16
          %s398 = scalar_lea.hbm %s4, %s397
          %s400 = sshll.u32 %s389, 4
          %s401 = int_to_ptr.vmem [resolvable:$true] %s400
          %403 = dma.vmem_to_hbm [thread:$0]  %s401, 32, %s398, %s386
        $region40: #{tpu_custom_call.1} parent=31 // pred_fallthru
          _
      $region32: #{tpu_custom_call.1} parent=5 // pred_fallthru
        _
      %p404 = scmp.le.s32.totalorder 2, %s22
      // Predicated region
      $region41: #{tpu_custom_call.1} parent=5 // pred_check
        %p405 = pneg %p404
      $region42: #{tpu_custom_call.1} parent=5 // pred_check_branch
        %407 = sbr.rel (%p405) target = $region44
      $region43: #{tpu_custom_call.1} parent=5 // pred_region
        %s408 = ssub.s32 %s22, 2
        // Predicated region
        $region45: #{tpu_custom_call.1} parent=43 // pred_check
          %p409 = pneg %p133
        $region46: #{tpu_custom_call.1} parent=43 // pred_check_branch
          %411 = sbr.rel (%p409) target = $region48
        $region47: #{tpu_custom_call.1} parent=43 // pred_region
          %s412 = sand.u32 %s118, 1
          %s413 = scalar_lea.sflag [#allocation6], %s412
          %s414 = sand.u32 %s118, 1
          %s415 = smul.addr %s414, 2
          %s416 = scalar_lea.vmem [#allocation7], %s415
          %417 = dma.done %s413, 32
        $region48: #{tpu_custom_call.1} parent=43 // pred_fallthru
          _
      $region44: #{tpu_custom_call.1} parent=5 // pred_fallthru
        _
    $region6: #{tpu_custom_call.1} parent=1 // loop_footer
      %s26 = sadd.s32 1, %s22
    $region7: #{tpu_custom_call.1} parent=1 // loop_footer_branch
      %21 = sbr.rel target = $region3
    $region8: #{tpu_custom_call.1} parent=1 // loop_exit
      _
    %418 = vsyncpa [#allocation5], 1
    %s419 = scalar_lea.sflag [#allocation5], 1
    %420 = vsyncpa %s419, 1
    %421 = vsyncpa [#allocation6], 1
    %s422 = scalar_lea.sflag [#allocation6], 1
    %423 = vsyncpa %s422, 1

</llo_original>
